<compile_context>
chip_gen: v7x
topology: tpu7x:2x2x1
jax: 0.10.0
libtpu: 0.0.40
codegen_flags: <defaults>
</compile_context>

<pallas_src>
import jax
import jax.numpy as jnp
from jax.experimental import pallas as pl
from jax.experimental.pallas import tpu as pltpu


_LANES = 128                          # TPU vreg lane width
_TARGET_TILE_BYTES = 2 * 1024 * 1024  # ~2 MiB per operand tile


def _copy_kernel(x_ref, o_ref):
    # Pure identity copy of the current (tile_rows, cols) block.
    o_ref[...] = x_ref[...]


def _round_up(n, m):
    return ((n + m - 1) // m) * m


def _sublane_multiple(itemsize: int) -> int:
    # f32 -> 8, bf16 -> 16, int8/fp8 -> 32 (packed-dtype friendly tiling).
    return max(8, (4 // max(1, itemsize)) * 8)


def _pallas_identity_copy(x_flat: jax.Array) -> jax.Array:
    """Streams a flat array HBM->VMEM->HBM with a tiled, pipelined copy."""
    total = x_flat.size
    if total == 0:
        return x_flat

    itemsize = jnp.dtype(x_flat.dtype).itemsize
    sub_mult = _sublane_multiple(itemsize)

    # Pick a lane-dense column count.  Prefer one that factors `total` exactly
    # with a sublane-aligned row count (no padding, no post-slice).
    cols = None
    for cand in (1024, 512, 256, 128):
        if total % cand == 0 and (total // cand) % sub_mult == 0:
            cols = cand
            break
    if cols is None:
        cols = 1024 if total >= 1024 else _LANES

    rows = pl.cdiv(total, cols)

    # Tile rows: multiple of the sublane packing factor, ~2 MiB per tile.
    max_tile_rows = max(
        sub_mult,
        (_TARGET_TILE_BYTES // (cols * itemsize)) // sub_mult * sub_mult,
    )
    tile_rows = min(_round_up(rows, sub_mult), max_tile_rows)

    padded_rows = _round_up(rows, tile_rows)
    padded_total = padded_rows * cols

    if padded_total != total:
        x_flat = jnp.pad(x_flat, (0, padded_total - total))
    x2d = jnp.reshape(x_flat, (padded_rows, cols))

    grid = (padded_rows // tile_rows,)

    out2d = pl.pallas_call(
        _copy_kernel,
        out_shape=jax.ShapeDtypeStruct((padded_rows, cols), x2d.dtype),
        grid=grid,
        in_specs=[pl.BlockSpec((tile_rows, cols), lambda i: (i, 0))],
        out_specs=pl.BlockSpec((tile_rows, cols), lambda i: (i, 0)),
        compiler_params=pltpu.CompilerParams(
            dimension_semantics=("parallel",),
        ),
        cost_estimate=pl.CostEstimate(
            flops=0,
            transcendentals=0,
            bytes_accessed=2 * padded_total * itemsize,
        ),
    )(x2d)

    out_flat = jnp.reshape(out2d, (padded_total,))
    if padded_total != total:
        out_flat = out_flat[:total]
    return out_flat


class View:
    """JAX/Pallas analogue of the PyTorch View module.

    forward(x) = x.view(x.size(0), *shape)

    Default path is a metadata-only jnp.reshape (exact torch .view semantics
    for a contiguous row-major tensor, zero HBM traffic).  Set
    materialize=True to force a physical tiled Pallas copy.
    """

    def __init__(self, *shape, materialize: bool = False):
        self.shape = tuple(shape)
        self.materialize = materialize

    def __call__(self, x: jax.Array) -> jax.Array:
        b = x.shape[0]
        out_shape = (b,) + self.shape

        if not self.materialize:
            # Metadata-only view: the recommended (free) path.
            return jnp.reshape(x, out_shape)

        # Materialized copy path: lane-dense tiled streaming copy kernel.
        out_flat = _pallas_identity_copy(jnp.reshape(x, (-1,)))
        return jnp.reshape(out_flat, out_shape)


if __name__ == "__main__":
    key = jax.random.PRNGKey(0)
    # Small NCHW input consistent with a conv-net feature map: (2, 4, 16, 16)
    x = jax.random.normal(key, (2, 4, 16, 16), dtype=jnp.float32)

    # Reference: row-major reshape == torch .view on a contiguous NCHW tensor.
    y_ref = jnp.reshape(x, (x.shape[0], 16, 64))

    # Fast (recommended) metadata-only path.
    view_fast = View(16, 64)
    y_fast = jax.block_until_ready(view_fast(x))

    # Pallas copy path: exercises the tiled identity-copy kernel once.
    view_copy = View(16, 64, materialize=True)
    y_copy = jax.block_until_ready(view_copy(x))

    assert y_fast.shape == (2, 16, 64), y_fast.shape
    assert y_copy.shape == (2, 16, 64), y_copy.shape
    assert y_copy.dtype == x.dtype
    assert bool(jnp.array_equal(y_fast, y_ref))
    assert bool(jnp.array_equal(y_copy, y_ref))

    print("KERNEL_OK")
</pallas_src>

<mosaic_0001>
module attributes {stable_mosaic.version = 11 : i64} {
  func.func @_copy_kernel(%arg0: i32, %arg1: memref<8x256xf32, #tpu.memory_space<vmem>>, %arg2: memref<8x256xf32, #tpu.memory_space<vmem>>) attributes {dimension_semantics = [#tpu.dimension_semantics<parallel>], iteration_bounds = array<i64: 1>, scalar_prefetch = 0 : i64, scratch_operands = 0 : i64, tpu.core_type = #tpu.core_type<tc>, window_params = [{transform_indices = @transform_0, window_bounds = array<i64: 8, 256>}, {transform_indices = @transform_1, window_bounds = array<i64: 8, 256>}]} {
    %c0 = arith.constant 0 : index
    %c0_0 = arith.constant 0 : index
    %0 = vector.load %arg1[%c0, %c0_0] : memref<8x256xf32, #tpu.memory_space<vmem>>, vector<8x256xf32>
    %c0_1 = arith.constant 0 : index
    %c0_2 = arith.constant 0 : index
    %1 = vector.load %arg2[%c0_1, %c0_2] : memref<8x256xf32, #tpu.memory_space<vmem>>, vector<8x256xf32>
    tpu.vector_store %arg2[%c0_1, %c0_2], %0 {strides = array<i32>} : memref<8x256xf32, #tpu.memory_space<vmem>>, vector<8x256xf32>,
    return
  }
  func.func @transform_0(%arg0: i32) -> (i32, i32) {
    %c0_i32 = arith.constant 0 : i32
    %c0_i32_0 = arith.constant 0 : i32
    return %arg0, %c0_i32 : i32, i32
  }
  func.func @transform_1(%arg0: i32) -> (i32, i32) {
    %c0_i32 = arith.constant 0 : i32
    %c0_i32_0 = arith.constant 0 : i32
    return %arg0, %c0_i32 : i32, i32
  }
}

</mosaic_0001>

<llo_original>
// kernel: tpu_custom_call.1
$region0: #{tpu_custom_call.1}
  #allocation0 [shape = 'u32[]', space=smem, size = 0x4, offset = 0x4, fixed_abs, tag = 'smem constant byte address 0x4 - core index']
  #allocation1 [shape = 'u32[144,128]{1,0:T(1,128)}', space=vmem, size = 0x12000, scoped, tag = 'internal scratch']
  %s0 = inlined_call_operand.hbm [shape: f32[8,256], index: 0, kind: input, shape index: {}]
  %s1 = inlined_call_operand.hbm [shape: f32[8,256], index: 1, kind: output, shape index: {}]
  %s2 = sld [smem:[#allocation0]]
  $region18: #{tpu_custom_call.1} parent=0
    _
  %s4 = ssub.s32 1, %s2
  %s5 = scalar_select 0, %s4, %s2
  $region1: #{tpu_custom_call.1} parent=0
    #allocation2 [shape = 'u8[8192]{0}', space=vmem, size = 0x2000, scoped, tag = 'input window, operand 0, single buffered']
    #allocation3 [shape = 's32[1]{0}', space=sflag, size = 0x4, scoped, tag = 'scoped memory for tpu_custom_call.1']
    #allocation4 [shape = 's32[1]{0}', space=sflag, size = 0x4, scoped, tag = 'scoped memory for tpu_custom_call.1']
    #allocation5 [shape = 'u8[8192]{0}', space=vmem, size = 0x2000, scoped, tag = 'output window, operand 0, single buffered']
    %6 = vsyncpa [#allocation3], 0
    %7 = vsyncpa [#allocation4], 0
    // Predicated region
    $region2: #{tpu_custom_call.1} parent=1 // pred_check
      _
    $region3: #{tpu_custom_call.1} parent=1 // pred_check_branch
      %9 = sbr.rel (0) target = $region5
    $region4: #{tpu_custom_call.1} parent=1 // pred_region
      %s11 = ssub.s32 256, 256
      %12 = vsyncadd [#allocation3], %s11
      %s14 = sshll.u32 [#allocation2], 4
      %s15 = int_to_ptr.vmem [resolvable:$true] %s14
      %17 = dma.hbm_to_vmem [thread:$0]  %s0, 256, %s15, [#allocation3]
    $region5: #{tpu_custom_call.1} parent=1 // pred_fallthru
      _
    // Predicated region
    $region6: #{tpu_custom_call.1} parent=1 // pred_check
      _
    $region7: #{tpu_custom_call.1} parent=1 // pred_check_branch
      %19 = sbr.rel (0) target = $region9
    $region8: #{tpu_custom_call.1} parent=1 // pred_region
      %20 = dma.done [#allocation3], 256
    $region9: #{tpu_custom_call.1} parent=1 // pred_fallthru
      _
    %v21 = vld [vmem:[#allocation2] sm:$0xff]
    %v22 = vld [vmem:[#allocation2 + $0x8] sm:$0xff]
    %23 = vst [vmem:[#allocation5] sm:$0xff] %v21
    %24 = vst [vmem:[#allocation5 + $0x8] sm:$0xff] %v22
    // Predicated region
    $region10: #{tpu_custom_call.1} parent=1 // pred_check
      _
    $region11: #{tpu_custom_call.1} parent=1 // pred_check_branch
      %26 = sbr.rel (0) target = $region13
    $region12: #{tpu_custom_call.1} parent=1 // pred_region
      %s28 = ssub.s32 256, 256
      %29 = vsyncadd [#allocation4], %s28
      %s31 = sshll.u32 [#allocation5], 4
      %s32 = int_to_ptr.vmem [resolvable:$true] %s31
      %34 = dma.vmem_to_hbm [thread:$0]  %s32, 256, %s1, [#allocation4]
    $region13: #{tpu_custom_call.1} parent=1 // pred_fallthru
      _
    // Predicated region
    $region14: #{tpu_custom_call.1} parent=1 // pred_check
      _
    $region15: #{tpu_custom_call.1} parent=1 // pred_check_branch
      %36 = sbr.rel (0) target = $region17
    $region16: #{tpu_custom_call.1} parent=1 // pred_region
      %37 = dma.done [#allocation4], 256
    $region17: #{tpu_custom_call.1} parent=1 // pred_fallthru
      _
    %38 = vsyncpa [#allocation3], 1
    %39 = vsyncpa [#allocation4], 1

</llo_original>
